<compile_context>
chip_gen: v6e
topology: v6e:2x2x1
jax: 0.10.0
libtpu: 0.0.40
codegen_flags: <defaults>
</compile_context>

<pallas_src>
import jax
import jax.numpy as jnp
from jax.experimental import pallas as pl
from jax.experimental.pallas import tpu as pltpu


# ---------------------------------------------------------------------------
# Kernel: one grid step == one BayesianLinear layer.
# ---------------------------------------------------------------------------
def _bayesian_net_kernel(x_ref, w_ref, b_ref, o_ref):
    l = pl.program_id(0)
    last = pl.num_programs(0) - 1

    # Seed the resident activation (carried in the output VMEM block) with x.
    @pl.when(l == 0)
    def _():
        o_ref[...] = x_ref[...]

    def stable_softplus(r):
        # softplus(r) = max(r, 0) + log1p(exp(-|r|))  -- no overflow for large r
        return jnp.maximum(r, 0.0) + jnp.log1p(jnp.exp(-jnp.abs(r)))

    # Reparameterized weight sample (VPU + EUP).  w_ref block is (1, 3, P, P):
    #   [0] = weight_mu, [1] = weight_rho, [2] = weight_eps  (already (in, out)).
    w = w_ref[0, 0] + stable_softplus(w_ref[0, 1]) * w_ref[0, 2]      # (P, P)

    # Reparameterized bias sample.  b_ref block is (1, 3, P).
    bm = b_ref[0]                                                      # (3, P)
    b = bm[0:1] + stable_softplus(bm[1:2]) * bm[2:3]                   # (1, P)

    y = jnp.dot(o_ref[...], w, preferred_element_type=jnp.float32) + b

    @pl.when(l < last)
    def _():
        o_ref[...] = jnp.maximum(y, 0.0)   # relu for all but the final layer

    @pl.when(l == last)
    def _():
        o_ref[...] = y                      # fc_final: no relu


# ---------------------------------------------------------------------------
# Wrapper: pad + pack parameters, single fused pallas_call.
# ---------------------------------------------------------------------------
def _pad2d(a, rows, cols):
    return jnp.pad(a, ((0, rows - a.shape[0]), (0, cols - a.shape[1])))


def _pad1d(a, n):
    return jnp.pad(a, (0, n - a.shape[0]))


def bayesian_net_forward(x, layer_params, layer_eps):
    """BayesianNet.forward: relu(fc1) -> relu(hidden)*n -> fc_final (no relu)."""
    n_layers = len(layer_params)
    batch, in_dim = x.shape
    out_dim = layer_params[-1][0].shape[0]

    feat_dims = [in_dim] + [p[0].shape[0] for p in layer_params]
    P = max(128, -(-max(feat_dims) // 128) * 128)   # lane-dense feature width
    B = max(8, -(-batch // 8) * 8)                  # sublane-aligned batch

    w_stack, b_stack = [], []
    for (wmu, wrho, bmu, brho), (weps, beps) in zip(layer_params, layer_eps):
        # Pre-transpose to (in, out), zero-pad to (P, P), and pack mu/rho/eps.
        w_stack.append(jnp.stack([_pad2d(wmu.T, P, P),
                                  _pad2d(wrho.T, P, P),
                                  _pad2d(weps.T, P, P)]))          # (3, P, P)
        b_stack.append(jnp.stack([_pad1d(bmu, P),
                                  _pad1d(brho, P),
                                  _pad1d(beps, P)]))               # (3, P)

    w_all = jnp.stack(w_stack)   # (L, 3, P, P)
    b_all = jnp.stack(b_stack)   # (L, 3, P)

    x_p = _pad2d(x, B, P)

    act_spec = pl.BlockSpec((B, P), lambda l: (0, 0))              # resident activation
    w_spec = pl.BlockSpec((1, 3, P, P), lambda l: (l, 0, 0, 0))    # per-layer weight pack
    b_spec = pl.BlockSpec((1, 3, P), lambda l: (l, 0, 0))          # per-layer bias pack

    out = pl.pallas_call(
        _bayesian_net_kernel,
        out_shape=jax.ShapeDtypeStruct((B, P), jnp.float32),
        grid=(n_layers,),
        in_specs=[act_spec, w_spec, b_spec],
        out_specs=act_spec,
        compiler_params=pltpu.CompilerParams(
            dimension_semantics=("arbitrary",)),   # layers are strictly sequential
    )(x_p, w_all, b_all)

    return out[:batch, :out_dim]
    # TODO(synk): train_model / kl_loss_function (Adam loop, KL divergence over
    # parameters) are host-side training logic, not part of the forward kernel.
    # TODO(synk): eps could be generated in-kernel via pltpu.prng_seed +
    # pltpu.stateful_normal to cut weight-stream HBM traffic by 1/3, at the cost
    # of losing bit-exact comparability with an external reference.


# ---------------------------------------------------------------------------
# Parameter / noise setup (glue) and a pure-JAX reference.
# ---------------------------------------------------------------------------
def init_bayesian_linear(key, in_dim, out_dim):
    """Parameters mimic torch.randn init: weight_mu, weight_rho, bias_mu, bias_rho."""
    k1, k2, k3, k4 = jax.random.split(key, 4)
    return (
        jax.random.normal(k1, (out_dim, in_dim), jnp.float32),   # weight_mu
        jax.random.normal(k2, (out_dim, in_dim), jnp.float32),   # weight_rho
        jax.random.normal(k3, (out_dim,), jnp.float32),          # bias_mu
        jax.random.normal(k4, (out_dim,), jnp.float32),          # bias_rho
    )


def sample_eps(key, in_dim, out_dim):
    k1, k2 = jax.random.split(key)
    return (
        jax.random.normal(k1, (out_dim, in_dim), jnp.float32),   # eps for weight
        jax.random.normal(k2, (out_dim,), jnp.float32),          # eps for bias
    )


def bayesian_net_reference(x, layer_params, layer_eps):
    h = x
    n = len(layer_params)
    for i, ((wmu, wrho, bmu, brho), (weps, beps)) in enumerate(
            zip(layer_params, layer_eps)):
        w = wmu + jax.nn.softplus(wrho) * weps
        b = bmu + jax.nn.softplus(brho) * beps
        h = jnp.dot(h, w.T, precision=jax.lax.Precision.HIGHEST) + b
        if i < n - 1:
            h = jnp.maximum(h, 0.0)
    return h


if __name__ == "__main__":
    # Small shapes consistent with the module's forward:
    batch, input_dim, hidden_dim, output_dim, n_hidden = 8, 16, 32, 8, 4

    key = jax.random.PRNGKey(0)
    k_x, k_params, k_eps = jax.random.split(key, 3)

    x = jax.random.normal(k_x, (batch, input_dim), jnp.float32)

    # Layer dims: fc1, fc2..fc{n_hidden+1}, fc_final
    dims = ([(input_dim, hidden_dim)]
            + [(hidden_dim, hidden_dim)] * n_hidden
            + [(hidden_dim, output_dim)])

    param_keys = jax.random.split(k_params, len(dims))
    eps_keys = jax.random.split(k_eps, len(dims))
    layer_params = [init_bayesian_linear(pk, din, dout)
                    for pk, (din, dout) in zip(param_keys, dims)]
    layer_eps = [sample_eps(ek, din, dout)
                 for ek, (din, dout) in zip(eps_keys, dims)]

    out = bayesian_net_forward(x, layer_params, layer_eps)
    out = jax.block_until_ready(out)

    assert out.shape == (batch, output_dim), out.shape
    assert out.dtype == jnp.float32
    assert bool(jnp.all(jnp.isfinite(out)))

    ref = bayesian_net_reference(x, layer_params, layer_eps)
    rel_err = jnp.max(jnp.abs(out - ref)) / (jnp.max(jnp.abs(ref)) + 1e-6)
    assert float(rel_err) < 5e-2, float(rel_err)

    print("KERNEL_OK")
</pallas_src>

<mosaic_0001>
module attributes {stable_mosaic.version = 11 : i64} {
  func.func @_bayesian_net_kernel(%arg0: i32, %arg1: memref<8x128xf32, #tpu.memory_space<vmem>>, %arg2: memref<1x3x128x128xf32, #tpu.memory_space<vmem>>, %arg3: memref<1x3x128xf32, #tpu.memory_space<vmem>>, %arg4: memref<8x128xf32, #tpu.memory_space<vmem>>) attributes {dimension_semantics = [#tpu.dimension_semantics<arbitrary>], iteration_bounds = array<i64: 6>, scalar_prefetch = 0 : i64, scratch_operands = 0 : i64, tpu.core_type = #tpu.core_type<tc>, window_params = [{pipeline_mode = #tpu.pipeline_mode<synchronous>, transform_indices = @transform_0, window_bounds = array<i64: 8, 128>}, {transform_indices = @transform_1, window_bounds = array<i64: 1, 3, 128, 128>}, {transform_indices = @transform_2, window_bounds = array<i64: 1, 3, 128>}, {pipeline_mode = #tpu.pipeline_mode<synchronous>, transform_indices = @transform_3, window_bounds = array<i64: 8, 128>}]} {
    %c0_i32 = arith.constant 0 : i32
    %0 = arith.cmpi eq, %arg0, %c0_i32 : i32
    %1 = arith.extui %0 : i1 to i32
    %c0_i32_0 = arith.constant 0 : i32
    %2 = arith.cmpi ne, %1, %c0_i32_0 : i32
    scf.if %2 {
      %c0_22 = arith.constant 0 : index
      %c0_23 = arith.constant 0 : index
      %44 = vector.load %arg1[%c0_22, %c0_23] : memref<8x128xf32, #tpu.memory_space<vmem>>, vector<8x128xf32>
      %c0_24 = arith.constant 0 : index
      %c0_25 = arith.constant 0 : index
      %45 = vector.load %arg4[%c0_24, %c0_25] : memref<8x128xf32, #tpu.memory_space<vmem>>, vector<8x128xf32>
      tpu.vector_store %arg4[%c0_24, %c0_25], %44 {strides = array<i32>} : memref<8x128xf32, #tpu.memory_space<vmem>>, vector<8x128xf32>,
    } else {
    }
    %c0 = arith.constant 0 : index
    %c0_1 = arith.constant 0 : index
    %c0_2 = arith.constant 0 : index
    %c0_3 = arith.constant 0 : index
    %3 = vector.load %arg2[%c0, %c0_1, %c0_2, %c0_3] : memref<1x3x128x128xf32, #tpu.memory_space<vmem>>, vector<1x1x128x128xf32>
    %4 = vector.shape_cast %3 : vector<1x1x128x128xf32> to vector<128x128xf32>
    %c0_4 = arith.constant 0 : index
    %c1 = arith.constant 1 : index
    %c0_5 = arith.constant 0 : index
    %c0_6 = arith.constant 0 : index
    %5 = vector.load %arg2[%c0_4, %c1, %c0_5, %c0_6] : memref<1x3x128x128xf32, #tpu.memory_space<vmem>>, vector<1x1x128x128xf32>
    %6 = vector.shape_cast %5 : vector<1x1x128x128xf32> to vector<128x128xf32>
    %cst = arith.constant 0.000000e+00 : f32
    %7 = vector.broadcast %cst : f32 to vector<128x128xf32>
    %8 = arith.maximumf %6, %7 : vector<128x128xf32>
    %9 = math.absf %6 : vector<128x128xf32>
    %cst_7 = arith.constant 0.000000e+00 : f32
    %10 = vector.broadcast %cst_7 : f32 to vector<128x128xf32>
    %11 = arith.subf %10, %9 : vector<128x128xf32>
    %12 = math.exp %11 : vector<128x128xf32>
    %13 = math.log1p %12 : vector<128x128xf32>
    %14 = arith.addf %8, %13 : vector<128x128xf32>
    %c0_8 = arith.constant 0 : index
    %c2 = arith.constant 2 : index
    %c0_9 = arith.constant 0 : index
    %c0_10 = arith.constant 0 : index
    %15 = vector.load %arg2[%c0_8, %c2, %c0_9, %c0_10] : memref<1x3x128x128xf32, #tpu.memory_space<vmem>>, vector<1x1x128x128xf32>
    %16 = vector.shape_cast %15 : vector<1x1x128x128xf32> to vector<128x128xf32>
    %17 = arith.mulf %14, %16 : vector<128x128xf32>
    %18 = arith.addf %4, %17 : vector<128x128xf32>
    %c0_11 = arith.constant 0 : index
    %c0_12 = arith.constant 0 : index
    %c0_13 = arith.constant 0 : index
    %19 = vector.load %arg3[%c0_11, %c0_12, %c0_13] : memref<1x3x128xf32, #tpu.memory_space<vmem>>, vector<1x3x128xf32>
    %20 = vector.shape_cast %19 : vector<1x3x128xf32> to vector<3x128xf32>
    %21 = vector.extract_strided_slice %20 {offsets = [0, 0], sizes = [1, 128], strides = [1, 1]} : vector<3x128xf32> to vector<1x128xf32>
    %22 = vector.extract_strided_slice %20 {offsets = [1, 0], sizes = [1, 128], strides = [1, 1]} : vector<3x128xf32> to vector<1x128xf32>
    %cst_14 = arith.constant 0.000000e+00 : f32
    %23 = vector.broadcast %cst_14 : f32 to vector<1x128xf32>
    %24 = arith.maximumf %22, %23 : vector<1x128xf32>
    %25 = math.absf %22 : vector<1x128xf32>
    %cst_15 = arith.constant 0.000000e+00 : f32
    %26 = vector.broadcast %cst_15 : f32 to vector<1x128xf32>
    %27 = arith.subf %26, %25 : vector<1x128xf32>
    %28 = math.exp %27 : vector<1x128xf32>
    %29 = math.log1p %28 : vector<1x128xf32>
    %30 = arith.addf %24, %29 : vector<1x128xf32>
    %31 = vector.extract_strided_slice %20 {offsets = [2, 0], sizes = [1, 128], strides = [1, 1]} : vector<3x128xf32> to vector<1x128xf32>
    %32 = arith.mulf %30, %31 : vector<1x128xf32>
    %33 = arith.addf %21, %32 : vector<1x128xf32>
    %c0_16 = arith.constant 0 : index
    %c0_17 = arith.constant 0 : index
    %34 = vector.load %arg4[%c0_16, %c0_17] : memref<8x128xf32, #tpu.memory_space<vmem>>, vector<8x128xf32>
    %cst_18 = arith.constant dense<0.000000e+00> : vector<8x128xf32>
    %35 = tpu.matmul %34, %18, %cst_18 {dimension_numbers = #tpu.dot_dimension_numbers<[1], [0], [0], [1], [0, 0, 1, 1], [], []>} : vector<8x128xf32>, vector<128x128xf32>, vector<8x128xf32> -> vector<8x128xf32>
    %36 = vector.broadcast %33 : vector<1x128xf32> to vector<8x128xf32>
    %37 = arith.addf %35, %36 : vector<8x128xf32>
    %c5_i32 = arith.constant 5 : i32
    %38 = arith.cmpi slt, %arg0, %c5_i32 : i32
    %39 = arith.extui %38 : i1 to i32
    %c0_i32_19 = arith.constant 0 : i32
    %40 = arith.cmpi ne, %39, %c0_i32_19 : i32
    scf.if %40 {
      %cst_22 = arith.constant 0.000000e+00 : f32
      %44 = vector.broadcast %cst_22 : f32 to vector<8x128xf32>
      %45 = arith.maximumf %37, %44 : vector<8x128xf32>
      %c0_23 = arith.constant 0 : index
      %c0_24 = arith.constant 0 : index
      %46 = vector.load %arg4[%c0_23, %c0_24] : memref<8x128xf32, #tpu.memory_space<vmem>>, vector<8x128xf32>
      tpu.vector_store %arg4[%c0_23, %c0_24], %45 {strides = array<i32>} : memref<8x128xf32, #tpu.memory_space<vmem>>, vector<8x128xf32>,
    } else {
    }
    %c5_i32_20 = arith.constant 5 : i32
    %41 = arith.cmpi eq, %arg0, %c5_i32_20 : i32
    %42 = arith.extui %41 : i1 to i32
    %c0_i32_21 = arith.constant 0 : i32
    %43 = arith.cmpi ne, %42, %c0_i32_21 : i32
    scf.if %43 {
      %c0_22 = arith.constant 0 : index
      %c0_23 = arith.constant 0 : index
      %44 = vector.load %arg4[%c0_22, %c0_23] : memref<8x128xf32, #tpu.memory_space<vmem>>, vector<8x128xf32>
      tpu.vector_store %arg4[%c0_22, %c0_23], %37 {strides = array<i32>} : memref<8x128xf32, #tpu.memory_space<vmem>>, vector<8x128xf32>,
    } else {
    }
    return
  }
  func.func @transform_0(%arg0: i32) -> (i32, i32) {
    %c0_i32 = arith.constant 0 : i32
    %c0_i32_0 = arith.constant 0 : i32
    %c0_i32_1 = arith.constant 0 : i32
    return %c0_i32, %c0_i32_0 : i32, i32
  }
  func.func @transform_1(%arg0: i32) -> (i32, i32, i32, i32) {
    %c0_i32 = arith.constant 0 : i32
    %c0_i32_0 = arith.constant 0 : i32
    %c0_i32_1 = arith.constant 0 : i32
    %c0_i32_2 = arith.constant 0 : i32
    return %arg0, %c0_i32, %c0_i32_0, %c0_i32_1 : i32, i32, i32, i32
  }
  func.func @transform_2(%arg0: i32) -> (i32, i32, i32) {
    %c0_i32 = arith.constant 0 : i32
    %c0_i32_0 = arith.constant 0 : i32
    %c0_i32_1 = arith.constant 0 : i32
    return %arg0, %c0_i32, %c0_i32_0 : i32, i32, i32
  }
  func.func @transform_3(%arg0: i32) -> (i32, i32) {
    %c0_i32 = arith.constant 0 : i32
    %c0_i32_0 = arith.constant 0 : i32
    %c0_i32_1 = arith.constant 0 : i32
    return %c0_i32, %c0_i32_0 : i32, i32
  }
}

</mosaic_0001>

<llo_original>
// kernel: tpu_custom_call.1
$region0: #{tpu_custom_call.1}
  #allocation0 [shape = 'u32[]', space=smem, size = 0x4, offset = 0x4, fixed_abs, tag = 'smem constant byte address 0x4 - core index']
  #allocation1 [shape = 'u32[144,128]{1,0:T(1,128)}', space=vmem, size = 0x12000, scoped, tag = 'internal scratch']
  %s0 = inlined_call_operand.hbm [shape: f32[8,128], index: 0, kind: input, shape index: {}]
  %s1 = inlined_call_operand.hbm [shape: f32[6,3,128,128], index: 1, kind: input, shape index: {}]
  %s2 = inlined_call_operand.hbm [shape: f32[6,3,128], index: 2, kind: input, shape index: {}]
  %s3 = inlined_call_operand.hbm [shape: f32[8,128], index: 3, kind: output, shape index: {}]
  %s4 = sld [smem:[#allocation0]]
  $region69: #{tpu_custom_call.1} parent=0
    _
  %s6 = ssub.s32 1, %s4
  %s7 = scalar_select 0, %s6, %s4
  $region1: #{tpu_custom_call.1} parent=0
    #allocation2 [shape = 'u8[4096]{0}', space=vmem, size = 0x1000, scoped, tag = 'input window, operand 0, single buffered']
    #allocation3 [shape = 's32[2]{0}', space=sflag, size = 0x8, scoped, tag = 'scoped memory for tpu_custom_call.1']
    #allocation4 [shape = 's32[2]{0}', space=sflag, size = 0x8, scoped, tag = 'scoped memory for tpu_custom_call.1']
    #allocation5 [shape = 'u8[393216]{0}', space=vmem, size = 0x60000, scoped, tag = 'input window, operand 1']
    #allocation6 [shape = 's32[2]{0}', space=sflag, size = 0x8, scoped, tag = 'scoped memory for tpu_custom_call.1']
    #allocation7 [shape = 'u8[4096]{0}', space=vmem, size = 0x1000, scoped, tag = 'input window, operand 2']
    #allocation8 [shape = 'u8[4096]{0}', space=vmem, size = 0x1000, scoped, tag = 'output window, operand 0, single buffered']
    %8 = vsyncpa [#allocation3], 0
    %9 = vsyncpa [#allocation6], 0
    %s10 = scalar_lea.sflag [#allocation6], 1
    %11 = vsyncpa %s10, 0
    %12 = vsyncpa [#allocation4], 0
    loop: start=0, step=1, limit=8
    $region2: #{tpu_custom_call.1} parent=1 // loop_pre_header
      _
    $region3: #{tpu_custom_call.1} parent=1 // loop_header
      %s14 = sphi 0, %s18
      %p15 = scmp.ge.s32.totalorder %s14, 8
      %s22 = sphi 0, %s22
      %s24 = sphi 0, %s22
      %s25 = sphi 0, %s24
      %s39 = sphi 0, %s25
      %s45 = sphi 0, %s47
      %s48 = sphi 0, %s45
      %s49 = sphi 0, %s48
      %s65 = sphi 0, %s49
      %s71 = sphi 0, %s73
      %s74 = sphi 0, %s71
      %s75 = sphi 0, %s74
      %s91 = sphi 0, %s75
      %s95 = sphi 0, %s95
      %s97 = sphi 0, %s95
      %s98 = sphi 0, %s97
      %s112 = sphi 0, %s98
    $region4: #{tpu_custom_call.1} parent=1 // loop_header_branch
      %17 = sbr.rel (%p15) target = $region8
    $region5: #{tpu_custom_call.1} parent=1 // loop_body
      %s19 = ssub.s32 %s14, 1
      %s20 = ssub.s32 %s14, 2
      %s21 = sadd.s32 %s14, 1
      %s23 = sadd.s32 %s22, 1
      %p26 = scmp.eq.s32.totalorder %s14, 5
      %p27 = scmp.ne.s32.totalorder %s22, %s24
      %p28 = scmp.eq.s32.totalorder %s14, 0
      %p29 = por %p27, %p28
      %p30 = scmp.ne.s32.totalorder %s22, %s24
      %p31 = scmp.eq.s32.totalorder %s19, 5
      %p32 = por %p30, %p31
      %p33 = scmp.ne.s32.totalorder %s24, %s25
      %p34 = scmp.eq.s32.totalorder %s19, 0
      %p35 = por %p33, %p34
      %p36 = scmp.ne.s32.totalorder %s24, %s25
      %p37 = scmp.eq.s32.totalorder %s20, 5
      %p38 = por %p36, %p37
      %p40 = scmp.ne.s32.totalorder %s25, %s39
      %p41 = scmp.eq.s32.totalorder %s20, 0
      %p42 = por %p40, %p41
      %s43 = ssub.s32 %s14, %s21
      %p44 = scmp.eq.s32.totalorder %s43, 0
      %s46 = sadd.s32 %s45, 1
      %s47 = scalar_select %p44, %s45, %s46
      %p50 = pneg %p44
      %p51 = scmp.eq.s32.totalorder %s14, 5
      %p52 = por %p50, %p51
      %p53 = scmp.ne.s32.totalorder %s45, %s48
      %p54 = scmp.eq.s32.totalorder %s14, 0
      %p55 = por %p53, %p54
      %p56 = scmp.ne.s32.totalorder %s45, %s48
      %p57 = scmp.eq.s32.totalorder %s19, 5
      %p58 = por %p56, %p57
      %p59 = scmp.ne.s32.totalorder %s48, %s49
      %p60 = scmp.eq.s32.totalorder %s19, 0
      %p61 = por %p59, %p60
      %p62 = scmp.ne.s32.totalorder %s48, %s49
      %p63 = scmp.eq.s32.totalorder %s20, 5
      %p64 = por %p62, %p63
      %p66 = scmp.ne.s32.totalorder %s49, %s65
      %p67 = scmp.eq.s32.totalorder %s20, 0
      %p68 = por %p66, %p67
      %s69 = ssub.s32 %s14, %s21
      %p70 = scmp.eq.s32.totalorder %s69, 0
      %s72 = sadd.s32 %s71, 1
      %s73 = scalar_select %p70, %s71, %s72
      %p76 = pneg %p70
      %p77 = scmp.eq.s32.totalorder %s14, 5
      %p78 = por %p76, %p77
      %p79 = scmp.ne.s32.totalorder %s71, %s74
      %p80 = scmp.eq.s32.totalorder %s14, 0
      %p81 = por %p79, %p80
      %p82 = scmp.ne.s32.totalorder %s71, %s74
      %p83 = scmp.eq.s32.totalorder %s19, 5
      %p84 = por %p82, %p83
      %p85 = scmp.ne.s32.totalorder %s74, %s75
      %p86 = scmp.eq.s32.totalorder %s19, 0
      %p87 = por %p85, %p86
      %p88 = scmp.ne.s32.totalorder %s74, %s75
      %p89 = scmp.eq.s32.totalorder %s20, 5
      %p90 = por %p88, %p89
      %p92 = scmp.ne.s32.totalorder %s75, %s91
      %p93 = scmp.eq.s32.totalorder %s20, 0
      %p94 = por %p92, %p93
      %s96 = sadd.s32 %s95, 1
      %p99 = scmp.eq.s32.totalorder %s14, 5
      %p100 = scmp.ne.s32.totalorder %s95, %s97
      %p101 = scmp.eq.s32.totalorder %s14, 0
      %p102 = por %p100, %p101
      %p103 = scmp.ne.s32.totalorder %s95, %s97
      %p104 = scmp.eq.s32.totalorder %s19, 5
      %p105 = por %p103, %p104
      %p106 = scmp.ne.s32.totalorder %s97, %s98
      %p107 = scmp.eq.s32.totalorder %s19, 0
      %p108 = por %p106, %p107
      %p109 = scmp.ne.s32.totalorder %s97, %s98
      %p110 = scmp.eq.s32.totalorder %s20, 5
      %p111 = por %p109, %p110
      %p113 = scmp.ne.s32.totalorder %s98, %s112
      %p114 = scmp.eq.s32.totalorder %s20, 0
      %p115 = por %p113, %p114
      %p116 = scmp.le.s32.totalorder 1, %s14
      %p117 = scmp.lt.s32.totalorder %s14, 7
      %p118 = pnand %p116, %p117
      %p119 = pneg %p118
      // Predicated region
      $region9: #{tpu_custom_call.1} parent=5 // pred_check
        _
      $region10: #{tpu_custom_call.1} parent=5 // pred_check_branch
        %121 = sbr.rel (%p118) target = $region12
      $region11: #{tpu_custom_call.1} parent=5 // pred_region
        %s122 = ssub.s32 %s14, 1
        // Predicated region
        $region13: #{tpu_custom_call.1} parent=11 // pred_check
          %p123 = pneg %p35
        $region14: #{tpu_custom_call.1} parent=11 // pred_check_branch
          %125 = sbr.rel (%p123) target = $region16
        $region15: #{tpu_custom_call.1} parent=11 // pred_region
          %s127 = ssub.s32 128, 128
          %128 = vsyncadd [#allocation3], %s127
          %s130 = sshll.u32 [#allocation2], 4
          %s131 = int_to_ptr.vmem [resolvable:$true] %s130
          %133 = dma.hbm_to_vmem [thread:$0]  %s0, 128, %s131, [#allocation3]
        $region16: #{tpu_custom_call.1} parent=11 // pred_fallthru
          _
      $region12: #{tpu_custom_call.1} parent=5 // pred_fallthru
        _
      %p134 = scmp.lt.s32.totalorder %s14, 6
      // Predicated region
      $region17: #{tpu_custom_call.1} parent=5 // pred_check
        %p135 = pneg %p134
      $region18: #{tpu_custom_call.1} parent=5 // pred_check_branch
        %137 = sbr.rel (%p135) target = $region20
      $region19: #{tpu_custom_call.1} parent=5 // pred_region
        // Predicated region
        $region21: #{tpu_custom_call.1} parent=19 // pred_check
          %p138 = pneg %p55
        $region22: #{tpu_custom_call.1} parent=19 // pred_check_branch
          %140 = sbr.rel (%p138) target = $region24
        $region23: #{tpu_custom_call.1} parent=19 // pred_region
          %s141 = sand.u32 %s14, 1
          %s142 = scalar_lea.sflag [#allocation6], %s141
          %s143 = sand.u32 %s45, 1
          %s144 = smul.addr %s143, 384
          %s145 = scalar_lea.vmem [#allocation5], %s144
          %s147 = ssub.s32 6144, 6144
          %148 = vsyncadd %s142, %s147
          %s149 = smul.addr %s14, 48
          %s150 = smul.addr %s149, 128
          %s151 = scalar_lea.hbm %s1, %s150
          %s152 = sshll.u32 %s145, 4
          %s153 = int_to_ptr.vmem [resolvable:$true] %s152
          %158 = dma.hbm_to_vmem [thread:$0]  %s151, 6144, %s153, %s142, 128, 128, 8
        $region24: #{tpu_custom_call.1} parent=19 // pred_fallthru
          _
        // Predicated region
        $region25: #{tpu_custom_call.1} parent=19 // pred_check
          %p159 = pneg %p81
        $region26: #{tpu_custom_call.1} parent=19 // pred_check_branch
          %161 = sbr.rel (%p159) target = $region28
        $region27: #{tpu_custom_call.1} parent=19 // pred_region
          %s162 = sand.u32 %s14, 1
          %s163 = scalar_lea.sflag [#allocation6], %s162
          %s164 = sand.u32 %s71, 1
          %s165 = smul.addr %s164, 4
          %s166 = scalar_lea.vmem [#allocation7], %s165
          %s168 = ssub.s32 64, 64
          %169 = vsyncadd %s163, %s168
          %s170 = smul.addr %s14, 64
          %s171 = scalar_lea.hbm %s2, %s170
          %s173 = sshll.u32 %s166, 4
          %s174 = int_to_ptr.vmem [resolvable:$true] %s173
          %176 = dma.hbm_to_vmem [thread:$0]  %s171, 64, %s174, %s163
        $region28: #{tpu_custom_call.1} parent=19 // pred_fallthru
          _
      $region20: #{tpu_custom_call.1} parent=5 // pred_fallthru
        _
      %p177 = scmp.le.s32.totalorder 1, %s14
      %p178 = scmp.lt.s32.totalorder %s14, 7
      %p179 = pnand %p177, %p178
      %p180 = pneg %p179
      // Predicated region
      $region29: #{tpu_custom_call.1} parent=5 // pred_check
        _
      $region30: #{tpu_custom_call.1} parent=5 // pred_check_branch
        %182 = sbr.rel (%p179) target = $region32
      $region31: #{tpu_custom_call.1} parent=5 // pred_region
        %s183 = ssub.s32 %s14, 1
        // Predicated region
        $region33: #{tpu_custom_call.1} parent=31 // pred_check
          %p184 = pneg %p35
        $region34: #{tpu_custom_call.1} parent=31 // pred_check_branch
          %186 = sbr.rel (%p184) target = $region36
        $region35: #{tpu_custom_call.1} parent=31 // pred_region
          %187 = dma.done [#allocation3], 128
        $region36: #{tpu_custom_call.1} parent=31 // pred_fallthru
          _
        %s188 = sand.u32 %s19, 1
        %s189 = scalar_lea.sflag [#allocation6], %s188
        %s190 = sand.u32 %s48, 1
        %s191 = smul.addr %s190, 384
        %s192 = scalar_lea.vmem [#allocation5], %s191
        // Predicated region
        $region37: #{tpu_custom_call.1} parent=31 // pred_check
          %p193 = pneg %p61
        $region38: #{tpu_custom_call.1} parent=31 // pred_check_branch
          %195 = sbr.rel (%p193) target = $region40
        $region39: #{tpu_custom_call.1} parent=31 // pred_region
          %196 = dma.done %s189, 6144
        $region40: #{tpu_custom_call.1} parent=31 // pred_fallthru
          _
        %s197 = sand.u32 %s19, 1
        %s198 = scalar_lea.sflag [#allocation6], %s197
        %s199 = sand.u32 %s74, 1
        %s200 = smul.addr %s199, 4
        %s201 = scalar_lea.vmem [#allocation7], %s200
        // Predicated region
        $region41: #{tpu_custom_call.1} parent=31 // pred_check
          %p202 = pneg %p87
        $region42: #{tpu_custom_call.1} parent=31 // pred_check_branch
          %204 = sbr.rel (%p202) target = $region44
        $region43: #{tpu_custom_call.1} parent=31 // pred_region
          %205 = dma.done %s198, 64
        $region44: #{tpu_custom_call.1} parent=31 // pred_fallthru
          _
        %p206 = pneg %p35
        %p207 = pneg %p32
        %s208 = sand.u32 %s19, 1
        %s209 = scalar_lea.sflag [#allocation6], %s208
        %s210 = sand.u32 %s48, 1
        %s211 = smul.addr %s210, 384
        %s212 = scalar_lea.vmem [#allocation5], %s211
        %p213 = pneg %p61
        %p214 = pneg %p58
        %s215 = sand.u32 %s19, 1
        %s216 = scalar_lea.sflag [#allocation6], %s215
        %s217 = sand.u32 %s74, 1
        %s218 = smul.addr %s217, 4
        %s219 = scalar_lea.vmem [#allocation7], %s218
        %p220 = pneg %p87
        %p221 = pneg %p84
        %p222 = pneg %p108
        %p223 = pneg %p105
        %p224 = scmp.eq.s32.totalorder %s19, 0
        // Predicated region
        $region45: #{tpu_custom_call.1} parent=31 // pred_check
          %p225 = pneg %p224
        $region46: #{tpu_custom_call.1} parent=31 // pred_check_branch
          %227 = sbr.rel (%p225) target = $region48
        $region47: #{tpu_custom_call.1} parent=31 // pred_region
          %v228 = vld [vmem:[#allocation2] sm:$0xff]
          %229 = vst [vmem:[#allocation8] sm:$0xff] %v228
        $region48: #{tpu_custom_call.1} parent=31 // pred_fallthru
          _
        %v230 = vld [vmem:[%s192] sm:$0xff]
        %v231 = vld [vmem:[%s192 + $0x8] sm:$0xff]
        %v232 = vld [vmem:[%s192 + $0x10] sm:$0xff]
        %v233 = vld [vmem:[%s192 + $0x18] sm:$0xff]
        %v234 = vld [vmem:[%s192 + $0x20] sm:$0xff]
        %v235 = vld [vmem:[%s192 + $0x28] sm:$0xff]
        %v236 = vld [vmem:[%s192 + $0x30] sm:$0xff]
        %v237 = vld [vmem:[%s192 + $0x38] sm:$0xff]
        %v238 = vld [vmem:[%s192 + $0x40] sm:$0xff]
        %v239 = vld [vmem:[%s192 + $0x48] sm:$0xff]
        %v240 = vld [vmem:[%s192 + $0x50] sm:$0xff]
        %v241 = vld [vmem:[%s192 + $0x58] sm:$0xff]
        %v242 = vld [vmem:[%s192 + $0x60] sm:$0xff]
        %v243 = vld [vmem:[%s192 + $0x68] sm:$0xff]
        %v244 = vld [vmem:[%s192 + $0x70] sm:$0xff]
        %v245 = vld [vmem:[%s192 + $0x78] sm:$0xff]
        %s246 = scalar_lea.vmem %s192, 128 [#allocation5]
        %v247 = vld [vmem:[%s246] sm:$0xff]
        %v248 = vld [vmem:[%s246 + $0x8] sm:$0xff]
        %v249 = vld [vmem:[%s246 + $0x10] sm:$0xff]
        %v250 = vld [vmem:[%s246 + $0x18] sm:$0xff]
        %v251 = vld [vmem:[%s246 + $0x20] sm:$0xff]
        %v252 = vld [vmem:[%s246 + $0x28] sm:$0xff]
        %v253 = vld [vmem:[%s246 + $0x30] sm:$0xff]
        %v254 = vld [vmem:[%s246 + $0x38] sm:$0xff]
        %v255 = vld [vmem:[%s246 + $0x40] sm:$0xff]
        %v256 = vld [vmem:[%s246 + $0x48] sm:$0xff]
        %v257 = vld [vmem:[%s246 + $0x50] sm:$0xff]
        %v258 = vld [vmem:[%s246 + $0x58] sm:$0xff]
        %v259 = vld [vmem:[%s246 + $0x60] sm:$0xff]
        %v260 = vld [vmem:[%s246 + $0x68] sm:$0xff]
        %v261 = vld [vmem:[%s246 + $0x70] sm:$0xff]
        %v262 = vld [vmem:[%s246 + $0x78] sm:$0xff]
        %v263 = vmax.f32 %v247, 0.0
        %v264 = vmax.f32 %v248, 0.0
        %v265 = vmax.f32 %v249, 0.0
        %v266 = vmax.f32 %v250, 0.0
        %v267 = vmax.f32 %v251, 0.0
        %v268 = vmax.f32 %v252, 0.0
        %v269 = vmax.f32 %v253, 0.0
        %v270 = vmax.f32 %v254, 0.0
        %v271 = vmax.f32 %v255, 0.0
        %v272 = vmax.f32 %v256, 0.0
        %v273 = vmax.f32 %v257, 0.0
        %v274 = vmax.f32 %v258, 0.0
        %v275 = vmax.f32 %v259, 0.0
        %v276 = vmax.f32 %v260, 0.0
        %v277 = vmax.f32 %v261, 0.0
        %v278 = vmax.f32 %v262, 0.0
        %v279 = vand.u32 2147483647, %v247
        %v280 = vand.u32 2147483647, %v248
        %v281 = vand.u32 2147483647, %v249
        %v282 = vand.u32 2147483647, %v250
        %v283 = vand.u32 2147483647, %v251
        %v284 = vand.u32 2147483647, %v252
        %v285 = vand.u32 2147483647, %v253
        %v286 = vand.u32 2147483647, %v254
        %v287 = vand.u32 2147483647, %v255
        %v288 = vand.u32 2147483647, %v256
        %v289 = vand.u32 2147483647, %v257
        %v290 = vand.u32 2147483647, %v258
        %v291 = vand.u32 2147483647, %v259
        %v292 = vand.u32 2147483647, %v260
        %v293 = vand.u32 2147483647, %v261
        %v294 = vand.u32 2147483647, %v262
        %v295 = vsub.f32 0.0, %v279
        %v296 = vsub.f32 0.0, %v280
        %v297 = vsub.f32 0.0, %v281
        %v298 = vsub.f32 0.0, %v282
        %v299 = vsub.f32 0.0, %v283
        %v300 = vsub.f32 0.0, %v284
        %v301 = vsub.f32 0.0, %v285
        %v302 = vsub.f32 0.0, %v286
        %v303 = vsub.f32 0.0, %v287
        %v304 = vsub.f32 0.0, %v288
        %v305 = vsub.f32 0.0, %v289
        %v306 = vsub.f32 0.0, %v290
        %v307 = vsub.f32 0.0, %v291
        %v308 = vsub.f32 0.0, %v292
        %v309 = vsub.f32 0.0, %v293
        %v310 = vsub.f32 0.0, %v294
        %v311 = vmul.f32 %v295, 1.442695
        %v312 = vpow.pop %v311
        %v313 = vmul.f32 %v296, 1.442695
        %v314 = vpow.pop %v313
        %v315 = vmul.f32 %v297, 1.442695
        %v316 = vpow.pop %v315
        %v317 = vmul.f32 %v298, 1.442695
        %v318 = vpow.pop %v317
        %v319 = vmul.f32 %v299, 1.442695
        %v320 = vpow.pop %v319
        %v321 = vmul.f32 %v300, 1.442695
        %v322 = vpow.pop %v321
        %v323 = vmul.f32 %v301, 1.442695
        %v324 = vpow.pop %v323
        %v325 = vmul.f32 %v302, 1.442695
        %v326 = vpow.pop %v325
        %v327 = vmul.f32 %v303, 1.442695
        %v328 = vpow.pop %v327
        %v329 = vmul.f32 %v304, 1.442695
        %v330 = vpow.pop %v329
        %v331 = vmul.f32 %v305, 1.442695
        %v332 = vpow.pop %v331
        %v333 = vmul.f32 %v306, 1.442695
        %v334 = vpow.pop %v333
        %v335 = vmul.f32 %v307, 1.442695
        %v336 = vpow.pop %v335
        %v337 = vmul.f32 %v308, 1.442695
        %v338 = vpow.pop %v337
        %v339 = vmul.f32 %v309, 1.442695
        %v340 = vpow.pop %v339
        %v341 = vmul.f32 %v310, 1.442695
        %v342 = vpow.pop %v341
        %v343 = vadd.f32 %v312, 1.0
        %v344 = vlog2.pop %v343
        %v345 = vmul.f32 %v344, 0.6931472
        %v346 = vmul.f32 -0.5, %v312
        %v347 = vadd.f32 %v346, 1.0
        %v348 = vmul.f32 %v347, %v312
        %v349 = vand.u32 2147483647, %v312
        %vm350 = vcmp.lt.f32.partialorder %v349, 0.0004427343
        %v351 = vsel %vm350, %v348, %v345
        %v352 = vadd.f32 %v314, 1.0
        %v353 = vlog2.pop %v352
        %v354 = vmul.f32 %v353, 0.6931472
        %v355 = vmul.f32 -0.5, %v314
        %v356 = vadd.f32 %v355, 1.0
        %v357 = vmul.f32 %v356, %v314
        %v358 = vand.u32 2147483647, %v314
        %vm359 = vcmp.lt.f32.partialorder %v358, 0.0004427343
        %v360 = vsel %vm359, %v357, %v354
        %v361 = vadd.f32 %v316, 1.0
        %v362 = vlog2.pop %v361
        %v363 = vmul.f32 %v362, 0.6931472
        %v364 = vmul.f32 -0.5, %v316
        %v365 = vadd.f32 %v364, 1.0
        %v366 = vmul.f32 %v365, %v316
        %v367 = vand.u32 2147483647, %v316
        %vm368 = vcmp.lt.f32.partialorder %v367, 0.0004427343
        %v369 = vsel %vm368, %v366, %v363
        %v370 = vadd.f32 %v318, 1.0
        %v371 = vlog2.pop %v370
        %v372 = vmul.f32 %v371, 0.6931472
        %v373 = vmul.f32 -0.5, %v318
        %v374 = vadd.f32 %v373, 1.0
        %v375 = vmul.f32 %v374, %v318
        %v376 = vand.u32 2147483647, %v318
        %vm377 = vcmp.lt.f32.partialorder %v376, 0.0004427343
        %v378 = vsel %vm377, %v375, %v372
        %v379 = vadd.f32 %v320, 1.0
        %v380 = vlog2.pop %v379
        %v381 = vmul.f32 %v380, 0.6931472
        %v382 = vmul.f32 -0.5, %v320
        %v383 = vadd.f32 %v382, 1.0
        %v384 = vmul.f32 %v383, %v320
        %v385 = vand.u32 2147483647, %v320
        %vm386 = vcmp.lt.f32.partialorder %v385, 0.0004427343
        %v387 = vsel %vm386, %v384, %v381
        %v388 = vadd.f32 %v322, 1.0
        %v389 = vlog2.pop %v388
        %v390 = vmul.f32 %v389, 0.6931472
        %v391 = vmul.f32 -0.5, %v322
        %v392 = vadd.f32 %v391, 1.0
        %v393 = vmul.f32 %v392, %v322
        %v394 = vand.u32 2147483647, %v322
        %vm395 = vcmp.lt.f32.partialorder %v394, 0.0004427343
        %v396 = vsel %vm395, %v393, %v390
        %v397 = vadd.f32 %v324, 1.0
        %v398 = vlog2.pop %v397
        %v399 = vmul.f32 %v398, 0.6931472
        %v400 = vmul.f32 -0.5, %v324
        %v401 = vadd.f32 %v400, 1.0
        %v402 = vmul.f32 %v401, %v324
        %v403 = vand.u32 2147483647, %v324
        %vm404 = vcmp.lt.f32.partialorder %v403, 0.0004427343
        %v405 = vsel %vm404, %v402, %v399
        %v406 = vadd.f32 %v326, 1.0
        %v407 = vlog2.pop %v406
        %v408 = vmul.f32 %v407, 0.6931472
        %v409 = vmul.f32 -0.5, %v326
        %v410 = vadd.f32 %v409, 1.0
        %v411 = vmul.f32 %v410, %v326
        %v412 = vand.u32 2147483647, %v326
        %vm413 = vcmp.lt.f32.partialorder %v412, 0.0004427343
        %v414 = vsel %vm413, %v411, %v408
        %v415 = vadd.f32 %v328, 1.0
        %v416 = vlog2.pop %v415
        %v417 = vmul.f32 %v416, 0.6931472
        %v418 = vmul.f32 -0.5, %v328
        %v419 = vadd.f32 %v418, 1.0
        %v420 = vmul.f32 %v419, %v328
        %v421 = vand.u32 2147483647, %v328
        %vm422 = vcmp.lt.f32.partialorder %v421, 0.0004427343
        %v423 = vsel %vm422, %v420, %v417
        %v424 = vadd.f32 %v330, 1.0
        %v425 = vlog2.pop %v424
        %v426 = vmul.f32 %v425, 0.6931472
        %v427 = vmul.f32 -0.5, %v330
        %v428 = vadd.f32 %v427, 1.0
        %v429 = vmul.f32 %v428, %v330
        %v430 = vand.u32 2147483647, %v330
        %vm431 = vcmp.lt.f32.partialorder %v430, 0.0004427343
        %v432 = vsel %vm431, %v429, %v426
        %v433 = vadd.f32 %v332, 1.0
        %v434 = vlog2.pop %v433
        %v435 = vmul.f32 %v434, 0.6931472
        %v436 = vmul.f32 -0.5, %v332
        %v437 = vadd.f32 %v436, 1.0
        %v438 = vmul.f32 %v437, %v332
        %v439 = vand.u32 2147483647, %v332
        %vm440 = vcmp.lt.f32.partialorder %v439, 0.0004427343
        %v441 = vsel %vm440, %v438, %v435
        %v442 = vadd.f32 %v334, 1.0
        %v443 = vlog2.pop %v442
        %v444 = vmul.f32 %v443, 0.6931472
        %v445 = vmul.f32 -0.5, %v334
        %v446 = vadd.f32 %v445, 1.0
        %v447 = vmul.f32 %v446, %v334
        %v448 = vand.u32 2147483647, %v334
        %vm449 = vcmp.lt.f32.partialorder %v448, 0.0004427343
        %v450 = vsel %vm449, %v447, %v444
        %v451 = vadd.f32 %v336, 1.0
        %v452 = vlog2.pop %v451
        %v453 = vmul.f32 %v452, 0.6931472
        %v454 = vmul.f32 -0.5, %v336
        %v455 = vadd.f32 %v454, 1.0
        %v456 = vmul.f32 %v455, %v336
        %v457 = vand.u32 2147483647, %v336
        %vm458 = vcmp.lt.f32.partialorder %v457, 0.0004427343
        %v459 = vsel %vm458, %v456, %v453
        %v460 = vadd.f32 %v338, 1.0
        %v461 = vlog2.pop %v460
        %v462 = vmul.f32 %v461, 0.6931472
        %v463 = vmul.f32 -0.5, %v338
        %v464 = vadd.f32 %v463, 1.0
        %v465 = vmul.f32 %v464, %v338
        %v466 = vand.u32 2147483647, %v338
        %vm467 = vcmp.lt.f32.partialorder %v466, 0.0004427343
        %v468 = vsel %vm467, %v465, %v462
        %v469 = vadd.f32 %v340, 1.0
        %v470 = vlog2.pop %v469
        %v471 = vmul.f32 %v470, 0.6931472
        %v472 = vmul.f32 -0.5, %v340
        %v473 = vadd.f32 %v472, 1.0
        %v474 = vmul.f32 %v473, %v340
        %v475 = vand.u32 2147483647, %v340
        %vm476 = vcmp.lt.f32.partialorder %v475, 0.0004427343
        %v477 = vsel %vm476, %v474, %v471
        %v478 = vadd.f32 %v342, 1.0
        %v479 = vlog2.pop %v478
        %v480 = vmul.f32 %v479, 0.6931472
        %v481 = vmul.f32 -0.5, %v342
        %v482 = vadd.f32 %v481, 1.0
        %v483 = vmul.f32 %v482, %v342
        %v484 = vand.u32 2147483647, %v342
        %vm485 = vcmp.lt.f32.partialorder %v484, 0.0004427343
        %v486 = vsel %vm485, %v483, %v480
        %v487 = vadd.f32 %v263, %v351
        %v488 = vadd.f32 %v264, %v360
        %v489 = vadd.f32 %v265, %v369
        %v490 = vadd.f32 %v266, %v378
        %v491 = vadd.f32 %v267, %v387
        %v492 = vadd.f32 %v268, %v396
        %v493 = vadd.f32 %v269, %v405
        %v494 = vadd.f32 %v270, %v414
        %v495 = vadd.f32 %v271, %v423
        %v496 = vadd.f32 %v272, %v432
        %v497 = vadd.f32 %v273, %v441
        %v498 = vadd.f32 %v274, %v450
        %v499 = vadd.f32 %v275, %v459
        %v500 = vadd.f32 %v276, %v468
        %v501 = vadd.f32 %v277, %v477
        %v502 = vadd.f32 %v278, %v486
        %s503 = scalar_lea.vmem %s192, 256 [#allocation5]
        %v504 = vld [vmem:[%s503] sm:$0xff]
        %v505 = vld [vmem:[%s503 + $0x8] sm:$0xff]
        %v506 = vld [vmem:[%s503 + $0x10] sm:$0xff]
        %v507 = vld [vmem:[%s503 + $0x18] sm:$0xff]
        %v508 = vld [vmem:[%s503 + $0x20] sm:$0xff]
        %v509 = vld [vmem:[%s503 + $0x28] sm:$0xff]
        %v510 = vld [vmem:[%s503 + $0x30] sm:$0xff]
        %v511 = vld [vmem:[%s503 + $0x38] sm:$0xff]
        %v512 = vld [vmem:[%s503 + $0x40] sm:$0xff]
        %v513 = vld [vmem:[%s503 + $0x48] sm:$0xff]
        %v514 = vld [vmem:[%s503 + $0x50] sm:$0xff]
        %v515 = vld [vmem:[%s503 + $0x58] sm:$0xff]
        %v516 = vld [vmem:[%s503 + $0x60] sm:$0xff]
        %v517 = vld [vmem:[%s503 + $0x68] sm:$0xff]
        %v518 = vld [vmem:[%s503 + $0x70] sm:$0xff]
        %v519 = vld [vmem:[%s503 + $0x78] sm:$0xff]
        %v520 = vmul.f32 %v487, %v504
        %v521 = vmul.f32 %v488, %v505
        %v522 = vmul.f32 %v489, %v506
        %v523 = vmul.f32 %v490, %v507
        %v524 = vmul.f32 %v491, %v508
        %v525 = vmul.f32 %v492, %v509
        %v526 = vmul.f32 %v493, %v510
        %v527 = vmul.f32 %v494, %v511
        %v528 = vmul.f32 %v495, %v512
        %v529 = vmul.f32 %v496, %v513
        %v530 = vmul.f32 %v497, %v514
        %v531 = vmul.f32 %v498, %v515
        %v532 = vmul.f32 %v499, %v516
        %v533 = vmul.f32 %v500, %v517
        %v534 = vmul.f32 %v501, %v518
        %v535 = vmul.f32 %v502, %v519
        %v536 = vadd.f32 %v230, %v520
        %v537 = vadd.f32 %v231, %v521
        %v538 = vadd.f32 %v232, %v522
        %v539 = vadd.f32 %v233, %v523
        %v540 = vadd.f32 %v234, %v524
        %v541 = vadd.f32 %v235, %v525
        %v542 = vadd.f32 %v236, %v526
        %v543 = vadd.f32 %v237, %v527
        %v544 = vadd.f32 %v238, %v528
        %v545 = vadd.f32 %v239, %v529
        %v546 = vadd.f32 %v240, %v530
        %v547 = vadd.f32 %v241, %v531
        %v548 = vadd.f32 %v242, %v532
        %v549 = vadd.f32 %v243, %v533
        %v550 = vadd.f32 %v244, %v534
        %v551 = vadd.f32 %v245, %v535
        %v552 = vld [vmem:[%s201] sm:$0x7]
        %v553 = vmax.f32 %v552, 0.0
        %v554 = vand.u32 2147483647, %v552
        %v555 = vsub.f32 0.0, %v554
        %v556 = vmul.f32 %v555, 1.442695
        %v557 = vpow.pop %v556
        %v558 = vadd.f32 %v557, 1.0
        %v559 = vlog2.pop %v558
        %v560 = vmul.f32 %v559, 0.6931472
        %v561 = vmul.f32 -0.5, %v557
        %v562 = vadd.f32 %v561, 1.0
        %v563 = vmul.f32 %v562, %v557
        %v564 = vand.u32 2147483647, %v557
        %vm565 = vcmp.lt.f32.partialorder %v564, 0.0004427343
        %v566 = vsel %vm565, %v563, %v560
        %v567 = vadd.f32 %v553, %v566
        %v569 = vrot.slane %v552, 1
        %v571 = vmul.f32 %v567, %v569
        %v573 = vrot.slane %v571, 1
        %v575 = vadd.f32 %v552, %v573
        %v576 = vld [vmem:[#allocation8] sm:$0xff]
        %v577 = vlaneseq
        %v578 = vshrl.u32 %v577, 7
        %v579 = vsub.s32 0, %v578
        %v580 = vrot.slane %v575, %v579
        %581 = vmatprep.subr.mxu0 0.0
        %582 = vmatpush1.msra.mxu0 %v551
        %583 = vmatprep.subr.mxu0 0.0
        %584 = vmatpush1.msra.mxu0 %v550
        %585 = vmatprep.subr.mxu0 0.0
        %586 = vmatpush1.msra.mxu0 %v549
        %587 = vmatprep.subr.mxu0 0.0
        %588 = vmatpush1.msra.mxu0 %v548
        %589 = vmatprep.subr.mxu0 0.0
        %590 = vmatpush1.msra.mxu0 %v547
        %591 = vmatprep.subr.mxu0 0.0
        %592 = vmatpush1.msra.mxu0 %v546
        %593 = vmatprep.subr.mxu0 0.0
        %594 = vmatpush1.msra.mxu0 %v545
        %595 = vmatprep.subr.mxu0 0.0
        %596 = vmatpush1.msra.mxu0 %v544
        %597 = vmatprep.subr.mxu0 0.0
        %598 = vmatpush1.msra.mxu0 %v543
        %599 = vmatprep.subr.mxu0 0.0
        %600 = vmatpush1.msra.mxu0 %v542
        %601 = vmatprep.subr.mxu0 0.0
        %602 = vmatpush1.msra.mxu0 %v541
        %603 = vmatprep.subr.mxu0 0.0
        %604 = vmatpush1.msra.mxu0 %v540
        %605 = vmatprep.subr.mxu0 0.0
        %606 = vmatpush1.msra.mxu0 %v539
        %607 = vmatprep.subr.mxu0 0.0
        %608 = vmatpush1.msra.mxu0 %v538
        %609 = vmatprep.subr.mxu0 0.0
        %610 = vmatpush1.msra.mxu0 %v537
        %611 = vmatprep.subr.mxu0 0.0
        %612 = vmatpush1.msra.mxu0 %v536
        %613 = vmatprep.subr.mxu0 0.0
        %614 = vmatpush2.msra.mxu0 0.0
        %615 = vmatprep.subr.mxu0 0.0
        %616 = vmatpush2.msra.mxu0 0.0
        %617 = vmatprep.subr.mxu0 0.0
        %618 = vmatpush2.msra.mxu0 0.0
        %619 = vmatprep.subr.mxu0 0.0
        %620 = vmatpush2.msra.mxu0 0.0
        %621 = vmatprep.subr.mxu0 0.0
        %622 = vmatpush2.msra.mxu0 0.0
        %623 = vmatprep.subr.mxu0 0.0
        %624 = vmatpush2.msra.mxu0 0.0
        %625 = vmatprep.subr.mxu0 0.0
        %626 = vmatpush2.msra.mxu0 0.0
        %627 = vmatprep.subr.mxu0 0.0
        %628 = vmatpush2.msra.mxu0 0.0
        %629 = vmatprep.subr.mxu0 0.0
        %630 = vmatpush2.msra.mxu0 0.0
        %631 = vmatprep.subr.mxu0 0.0
        %632 = vmatpush2.msra.mxu0 0.0
        %633 = vmatprep.subr.mxu0 0.0
        %634 = vmatpush2.msra.mxu0 0.0
        %635 = vmatprep.subr.mxu0 0.0
        %636 = vmatpush2.msra.mxu0 0.0
        %637 = vmatprep.subr.mxu0 0.0
        %638 = vmatpush2.msra.mxu0 0.0
        %639 = vmatprep.subr.mxu0 0.0
        %640 = vmatpush2.msra.mxu0 0.0
        %641 = vmatprep.subr.mxu0 0.0
        %642 = vmatpush2.msra.mxu0 0.0
        %643 = vmatprep.subr.mxu0 0.0
        %644 = vmatpush2.msra.mxu0 0.0
        %645 = vmatprep.mubr.f32.mxu0 0.0
        %646 = vmatmul.mubr.f32.gmra.mxu0 %v576
        %v647 = vpop.f32.mrf.mxu0
        %v648 = vadd.f32 %v580, %v647
        %v649 = vpop.f32.mrf.mxu0
        %650 = vdwg.mxu0
        %p651 = scmp.lt.s32.totalorder %s19, 5
        // Predicated region
        $region49: #{tpu_custom_call.1} parent=31 // pred_check
          %p652 = pneg %p651
        $region50: #{tpu_custom_call.1} parent=31 // pred_check_branch
          %654 = sbr.rel (%p652) target = $region52
        $region51: #{tpu_custom_call.1} parent=31 // pred_region
          %v655 = vmax.f32 %v648, 0.0
          %656 = vst [vmem:[#allocation8] sm:$0xff] %v655
        $region52: #{tpu_custom_call.1} parent=31 // pred_fallthru
          _
        %p657 = scmp.eq.s32.totalorder %s19, 5
        // Predicated region
        $region53: #{tpu_custom_call.1} parent=31 // pred_check
          %p658 = pneg %p657
        $region54: #{tpu_custom_call.1} parent=31 // pred_check_branch
          %660 = sbr.rel (%p658) target = $region56
        $region55: #{tpu_custom_call.1} parent=31 // pred_region
          %661 = vst [vmem:[#allocation8] sm:$0xff] %v648
        $region56: #{tpu_custom_call.1} parent=31 // pred_fallthru
          _
        // Predicated region
        $region57: #{tpu_custom_call.1} parent=31 // pred_check
          %p662 = pneg %p105
        $region58: #{tpu_custom_call.1} parent=31 // pred_check_branch
          %664 = sbr.rel (%p662) target = $region60
        $region59: #{tpu_custom_call.1} parent=31 // pred_region
          %s666 = ssub.s32 128, 128
          %667 = vsyncadd [#allocation4], %s666
          %s669 = sshll.u32 [#allocation8], 4
          %s670 = int_to_ptr.vmem [resolvable:$true] %s669
          %672 = dma.vmem_to_hbm [thread:$0]  %s670, 128, %s3, [#allocation4]
        $region60: #{tpu_custom_call.1} parent=31 // pred_fallthru
          _
        // Predicated region
        $region61: #{tpu_custom_call.1} parent=31 // pred_check
          %p673 = pneg %p105
        $region62: #{tpu_custom_call.1} parent=31 // pred_check_branch
          %675 = sbr.rel (%p673) target = $region64
        $region63: #{tpu_custom_call.1} parent=31 // pred_region
          %676 = dma.done [#allocation4], 128
        $region64: #{tpu_custom_call.1} parent=31 // pred_fallthru
          _
      $region32: #{tpu_custom_call.1} parent=5 // pred_fallthru
        _
      %p677 = scmp.le.s32.totalorder 2, %s14
      // Predicated region
      $region65: #{tpu_custom_call.1} parent=5 // pred_check
        %p678 = pneg %p677
      $region66: #{tpu_custom_call.1} parent=5 // pred_check_branch
        %680 = sbr.rel (%p678) target = $region68
      $region67: #{tpu_custom_call.1} parent=5 // pred_region
        %s681 = ssub.s32 %s14, 2
      $region68: #{tpu_custom_call.1} parent=5 // pred_fallthru
        _
    $region6: #{tpu_custom_call.1} parent=1 // loop_footer
      %s18 = sadd.s32 1, %s14
    $region7: #{tpu_custom_call.1} parent=1 // loop_footer_branch
      %13 = sbr.rel target = $region3
    $region8: #{tpu_custom_call.1} parent=1 // loop_exit
      _
    %682 = vsyncpa [#allocation3], 1
    %s683 = scalar_lea.sflag [#allocation3], 1
    %684 = vsyncpa %s683, 1
    %685 = vsyncpa [#allocation6], 1
    %s686 = scalar_lea.sflag [#allocation6], 1
    %687 = vsyncpa %s686, 1
    %688 = vsyncpa [#allocation4], 1
    %s689 = scalar_lea.sflag [#allocation4], 1
    %690 = vsyncpa %s689, 1

</llo_original>
